<compile_context>
chip_gen: v7x
topology: tpu7x:2x2x1
jax: 0.10.0
libtpu: 0.0.40
codegen_flags: <defaults>
</compile_context>

<pallas_src>
import functools

import numpy as np
import jax
import jax.numpy as jnp
from jax.experimental import pallas as pl
from jax.experimental.pallas import tpu as pltpu


# ----------------------------------------------------------------------------
# Helpers / tiling policy
# ----------------------------------------------------------------------------

_VMEM_LIMIT = 48 * 1024 * 1024      # valid on v5e/v6e (128 MiB) and v7x (64 MiB)
_VMEM_BUDGET = 40 * 1024 * 1024     # target working-set for kernel buffers


def _round_up(x, m):
    return ((x + m - 1) // m) * m


def _cdiv(a, b):
    return (a + b - 1) // b


def _pick_tm(M, K, N, a_bytes, has_res):
    """Pick an M tile: as large as possible (<=512), VMEM-bounded, >=2 steps
    when M is big enough (v7x megacore)."""
    mp8 = max(8, _round_up(M, 8))
    tm = 512
    while tm > mp8 and tm > 8:
        tm //= 2

    def need(t):
        n = 2 * t * K * a_bytes          # double-buffered A
        n += K * N * 2                   # resident bf16 weight
        n += 2 * t * N * 4               # double-buffered f32 output
        n += N * 4                       # bias
        if has_res:
            n += 2 * t * N * 4           # double-buffered f32 residual
        return n

    while need(tm) > _VMEM_BUDGET and tm > 8:
        tm //= 2

    # prefer >=2 grid steps so both v7x TensorCores get work
    if M >= 128 and _cdiv(M, tm) < 2:
        tm = max(8, _round_up(_cdiv(M, 2), 8))
    return tm


# ----------------------------------------------------------------------------
# Pallas kernels
# ----------------------------------------------------------------------------

@functools.lru_cache(maxsize=None)
def _get_matmul(Mp, TM, K, N, a_dtype_name, relu, has_res):
    """Tiled (over M) bf16-MXU matmul + bias (+ residual) (+ ReLU)."""
    del a_dtype_name  # only part of the cache key (block dtype comes from args)

    def kernel(*refs):
        if has_res:
            a_ref, w_ref, b_ref, r_ref, o_ref = refs
        else:
            a_ref, w_ref, b_ref, o_ref = refs
            r_ref = None
        a = a_ref[...].astype(jnp.bfloat16)
        acc = jnp.dot(a, w_ref[...], preferred_element_type=jnp.float32)
        acc = acc + b_ref[...]
        if has_res:
            acc = acc + r_ref[...]
        if relu:
            acc = jnp.maximum(acc, 0.0)
        o_ref[...] = acc

    in_specs = [
        pl.BlockSpec((TM, K), lambda i: (i, 0)),
        pl.BlockSpec((K, N), lambda i: (0, 0)),
        pl.BlockSpec((1, N), lambda i: (0, 0)),
    ]
    if has_res:
        in_specs.append(pl.BlockSpec((TM, N), lambda i: (i, 0)))

    f = pl.pallas_call(
        kernel,
        out_shape=jax.ShapeDtypeStruct((Mp, N), jnp.float32),
        grid=(Mp // TM,),
        in_specs=in_specs,
        out_specs=pl.BlockSpec((TM, N), lambda i: (i, 0)),
        compiler_params=pltpu.CompilerParams(
            dimension_semantics=("parallel",),
            vmem_limit_bytes=_VMEM_LIMIT,
        ),
    )
    return jax.jit(f)


def matmul_bias(a, w_bf16, b, relu=False, residual=None):
    """a: (M, K), w_bf16: (K, N) bf16, b: (N,), residual: (M, N) or None."""
    M, K = a.shape
    N = w_bf16.shape[1]
    has_res = residual is not None
    TM = _pick_tm(M, K, N, a.dtype.itemsize, has_res)
    Mp = _round_up(M, TM)
    if Mp != M:
        a = jnp.pad(a, ((0, Mp - M), (0, 0)))
        if has_res:
            residual = jnp.pad(residual, ((0, Mp - M), (0, 0)))
    args = [a, w_bf16, b.reshape(1, N).astype(jnp.float32)]
    if has_res:
        args.append(residual.astype(jnp.float32))
    out = _get_matmul(Mp, TM, K, N, str(a.dtype), bool(relu), has_res)(*args)
    return out[:M] if Mp != M else out


@functools.lru_cache(maxsize=None)
def _get_gff1(Mp, TM, nfeat, C, N):
    """Fused 1x1 conv over the concat of `nfeat` feature maps without
    materializing the (M, nfeat*C) concat: out = sum_i feat_i @ W_i + b."""

    def kernel(*refs):
        f_refs = refs[:nfeat]
        w_ref = refs[nfeat]          # (nfeat, C, N) bf16
        b_ref = refs[nfeat + 1]      # (1, N) f32
        o_ref = refs[nfeat + 2]
        acc = jnp.zeros((TM, N), jnp.float32) + b_ref[...]
        for j in range(nfeat):
            acc = acc + jnp.dot(f_refs[j][...].astype(jnp.bfloat16), w_ref[j],
                                preferred_element_type=jnp.float32)
        o_ref[...] = acc

    in_specs = [pl.BlockSpec((TM, C), lambda i: (i, 0)) for _ in range(nfeat)]
    in_specs.append(pl.BlockSpec((nfeat, C, N), lambda i: (0, 0, 0)))
    in_specs.append(pl.BlockSpec((1, N), lambda i: (0, 0)))

    f = pl.pallas_call(
        kernel,
        out_shape=jax.ShapeDtypeStruct((Mp, N), jnp.float32),
        grid=(Mp // TM,),
        in_specs=in_specs,
        out_specs=pl.BlockSpec((TM, N), lambda i: (i, 0)),
        compiler_params=pltpu.CompilerParams(
            dimension_semantics=("parallel",),
            vmem_limit_bytes=_VMEM_LIMIT,
        ),
    )
    return jax.jit(f)


def gff1_fused(features, w, b):
    """features: list of NHWC (B,h,w,C); w: (1,1,nfeat*C,N); b: (N,)."""
    nfeat = len(features)
    B, h, wd, C = features[0].shape
    M = B * h * wd
    N = w.shape[-1]
    TM = _pick_tm(M, nfeat * C, N, 4, False)
    Mp = _round_up(M, TM)
    flats = []
    for f in features:
        fr = f.reshape(M, C)
        if Mp != M:
            fr = jnp.pad(fr, ((0, Mp - M), (0, 0)))
        flats.append(fr)
    wr = w.reshape(nfeat, C, N).astype(jnp.bfloat16)
    out = _get_gff1(Mp, TM, nfeat, C, N)(
        *flats, wr, b.reshape(1, N).astype(jnp.float32))
    out = out[:M] if Mp != M else out
    return out.reshape(B, h, wd, N)


@functools.lru_cache(maxsize=None)
def _get_instnorm(Nb, L, C, CB, relu, has_res):
    """NHWC-native InstanceNorm2d (affine=False) + optional residual + ReLU.
    Blocks are (1, H*W, CB) — lane-dense in channels, no transposes."""

    def kernel(*refs):
        if has_res:
            x_ref, r_ref, o_ref = refs
        else:
            x_ref, o_ref = refs
            r_ref = None
        x = x_ref[...]
        mean = jnp.mean(x, axis=1, keepdims=True)
        var = jnp.mean(jnp.square(x - mean), axis=1, keepdims=True)
        y = (x - mean) * jax.lax.rsqrt(var + 1e-5)
        if has_res:
            y = y + r_ref[...]
        if relu:
            y = jnp.maximum(y, 0.0)
        o_ref[...] = y

    specs = [pl.BlockSpec((1, L, CB), lambda n, c: (n, 0, c))]
    if has_res:
        specs.append(pl.BlockSpec((1, L, CB), lambda n, c: (n, 0, c)))

    f = pl.pallas_call(
        kernel,
        out_shape=jax.ShapeDtypeStruct((Nb, L, C), jnp.float32),
        grid=(Nb, C // CB),
        in_specs=specs,
        out_specs=pl.BlockSpec((1, L, CB), lambda n, c: (n, 0, c)),
        compiler_params=pltpu.CompilerParams(
            dimension_semantics=("parallel", "parallel"),
            vmem_limit_bytes=_VMEM_LIMIT,
        ),
    )
    return jax.jit(f)


def instance_norm(x, relu=False, residual=None):
    """x: NHWC; normalizes over (H, W) per (n, c); optional fused res/ReLU."""
    N, H, W, C = x.shape
    L = H * W
    CB = 128 if (C % 128 == 0) else C
    args = [x.reshape(N, L, C)]
    if residual is not None:
        args.append(residual.reshape(N, L, C))
    y = _get_instnorm(N, L, C, CB, bool(relu), residual is not None)(*args)
    return y.reshape(N, H, W, C)


# ----------------------------------------------------------------------------
# Convolution wrapper (bf16 im2col glue + Pallas matmul)
# ----------------------------------------------------------------------------

def conv2d(x, w, b, stride=1, padding=0, pad_mode="constant", relu=False,
           residual=None):
    """x: NHWC f32, w: (KH, KW, Cin, Cout) bf16, b: (Cout,) f32."""
    kh, kw, cin, cout = w.shape
    if kh == 1 and kw == 1 and stride == 1 and padding == 0:
        # 1x1 conv: no im2col, no extra HBM copy (cast happens in-kernel).
        N, H, W, C = x.shape
        oh, ow = H, W
        patches = x.reshape(N * H * W, C)
    else:
        # TODO(synk): in-kernel tap accumulation (no HBM im2col) would remove
        # the remaining kh*kw patch expansion; patches are built in bf16 to
        # halve that traffic for now.
        x = x.astype(jnp.bfloat16)
        if padding > 0:
            mode = "reflect" if pad_mode == "reflect" else "constant"
            x = jnp.pad(x, ((0, 0), (padding, padding), (padding, padding),
                            (0, 0)), mode=mode)
        N, H, W, C = x.shape
        oh = (H - kh) // stride + 1
        ow = (W - kw) // stride + 1
        cols = []
        for i in range(kh):
            for j in range(kw):
                cols.append(
                    x[:, i:i + stride * (oh - 1) + 1:stride,
                      j:j + stride * (ow - 1) + 1:stride, :])
        patches = jnp.stack(cols, axis=3).reshape(N * oh * ow, kh * kw * C)

    wmat = w.reshape(kh * kw * cin, cout).astype(jnp.bfloat16)
    res_flat = None
    if residual is not None:
        res_flat = residual.reshape(N * oh * ow, cout)
    out = matmul_bias(patches, wmat, b, relu=relu, residual=res_flat)
    return out.reshape(N, oh, ow, cout)


def pixel_shuffle(x, r):
    """NHWC equivalent of torch.nn.PixelShuffle(r) on NCHW."""
    N, H, W, Crr = x.shape
    C = Crr // (r * r)
    x = x.reshape(N, H, W, C, r, r)
    x = jnp.transpose(x, (0, 1, 4, 2, 5, 3))
    return x.reshape(N, H * r, W * r, C)


# ----------------------------------------------------------------------------
# Parameter construction (deterministic, PyTorch-default-like uniform init)
# ----------------------------------------------------------------------------

class KeyGen:
    def __init__(self, seed=0):
        self.key = jax.random.PRNGKey(seed)
        self.i = 0

    def __call__(self):
        self.i += 1
        return jax.random.fold_in(self.key, self.i)


def conv_params(kg, kh, kw, cin, cout):
    fan_in = kh * kw * cin
    bound = 1.0 / float(np.sqrt(fan_in))
    w = jax.random.uniform(kg(), (kh, kw, cin, cout), jnp.float32, -bound, bound)
    b = jax.random.uniform(kg(), (cout,), jnp.float32, -bound, bound)
    return (w.astype(jnp.bfloat16), b)   # weights stored bf16 for the MXU


def build_params(input_channels=3):
    kg = KeyGen(0)
    p = {}
    # encoder_sm
    p["conv1_sm"] = conv_params(kg, 7, 7, input_channels + 1, 64)
    p["conv2_sm"] = conv_params(kg, 4, 4, 64, 128)
    p["conv3_sm"] = conv_params(kg, 4, 4, 128, 256)
    p["conv4_sm"] = conv_params(kg, 4, 4, 256, 256)
    p["sm_out"] = conv_params(kg, 3, 3, 256, 256)
    # 16 RDB(256, 32, 6)
    rdbs = []
    for _ in range(16):
        dense = [conv_params(kg, 3, 3, 256 + 32 * i, 32) for i in range(6)]
        lff = conv_params(kg, 1, 1, 256 + 32 * 6, 256)
        rdbs.append({"dense": dense, "lff": lff})
    p["rdbs"] = rdbs
    # gff
    p["gff1"] = conv_params(kg, 1, 1, 256 * 16, 256)
    p["gff2"] = conv_params(kg, 3, 3, 256, 256)
    # feature_recon: 4 x ResnetBlock(256)
    p["feature_recon"] = [
        (conv_params(kg, 3, 3, 256, 256), conv_params(kg, 3, 3, 256, 256))
        for _ in range(4)
    ]
    p["feature_mapping"] = conv_params(kg, 1, 1, 256, 152)
    # feature_recon_decoder
    p["dec_conv0"] = conv_params(kg, 3, 3, 256, 128 * 4)
    p["dec_rb1"] = (conv_params(kg, 3, 3, 128 + 256, 128),
                    conv_params(kg, 3, 3, 128, 128),
                    conv_params(kg, 1, 1, 128 + 256, 128))
    p["dec_conv4"] = conv_params(kg, 3, 3, 128, 64 * 4)
    p["dec_rb2"] = (conv_params(kg, 3, 3, 64 + 128, 64),
                    conv_params(kg, 3, 3, 64, 64),
                    conv_params(kg, 1, 1, 64 + 128, 64))
    p["feature_mapping_128"] = conv_params(kg, 1, 1, 128, 76)
    p["feature_mapping_256"] = conv_params(kg, 1, 1, 64, 76)
    return p


# ----------------------------------------------------------------------------
# Blocks
# ----------------------------------------------------------------------------

def rdb_forward(x, p):
    feat = x
    for (w, b) in p["dense"]:
        out = conv2d(feat, w, b, stride=1, padding=1, relu=True)
        feat = jnp.concatenate([feat, out], axis=-1)
    lw, lb = p["lff"]
    # residual (x + LFF(feat)) fused into the matmul epilogue
    return conv2d(feat, lw, lb, residual=x)


def resnet_block(x, p):
    (w1, b1), (w2, b2) = p
    y = conv2d(x, w1, b1, padding=1, pad_mode="reflect")
    y = instance_norm(y, relu=True)                      # IN + ReLU fused
    y = conv2d(y, w2, b2, padding=1, pad_mode="reflect")
    return instance_norm(y, residual=x)                  # IN + residual fused


def resnet_block_withshort(x, p):
    (w1, b1), (w2, b2), (ws, bs) = p
    short = conv2d(x, ws, bs, padding=0)                 # 1x1 shortcut
    y = conv2d(x, w1, b1, padding=1, pad_mode="reflect")
    y = instance_norm(y, relu=True)
    y = conv2d(y, w2, b2, padding=1, pad_mode="reflect")
    return instance_norm(y, residual=short)


# ----------------------------------------------------------------------------
# MAP_R forward
# ----------------------------------------------------------------------------

def map_r_forward(params, x, mask, masked_512, mask_512):
    to_nhwc = lambda t: jnp.transpose(t, (0, 2, 3, 1))
    to_nchw = lambda t: jnp.transpose(t, (0, 3, 1, 2))
    x = to_nhwc(x)
    mask = to_nhwc(mask)
    masked_512 = to_nhwc(masked_512)
    mask_512 = to_nhwc(mask_512)

    _x_input = x * (1.0 - mask) + mask
    # TODO(synk): `self.encoder(x_input, mask)` (conv1..3 + RN_B) is computed in
    # the PyTorch forward but its result is never consumed, and RN_B is defined
    # outside the provided file, so this dead branch is skipped.

    # ---- encoder_sm (ReLUs fused into the conv kernels) ----
    z = jnp.concatenate([masked_512, mask_512], axis=-1)
    z = conv2d(z, *params["conv1_sm"], stride=1, padding=3, pad_mode="reflect",
               relu=True)
    x_sm_256 = conv2d(z, *params["conv2_sm"], stride=2, padding=1, relu=True)
    x_sm_128 = conv2d(x_sm_256, *params["conv3_sm"], stride=2, padding=1,
                      relu=True)
    x_sm = conv2d(x_sm_128, *params["conv4_sm"], stride=2, padding=1, relu=True)

    # ---- RDN trunk ----
    x_sm_skip = conv2d(x_sm, *params["sm_out"], padding=1)
    local_features = []
    for i in range(16):
        x_sm_skip = rdb_forward(x_sm_skip, params["rdbs"][i])
        local_features.append(x_sm_skip)
    g = gff1_fused(local_features, *params["gff1"])       # no 4096-ch concat
    x_sm = conv2d(g, *params["gff2"], padding=1, residual=x_sm)

    # ---- feature_recon + mappings ----
    layout_64 = x_sm
    for rp in params["feature_recon"]:
        layout_64 = resnet_block(layout_64, rp)
    feature_recon_64 = conv2d(layout_64, *params["feature_mapping"], padding=0)

    # ---- feature_recon_decoder ----
    # ReLU fused into the conv (commutes with the PixelShuffle permutation).
    l = conv2d(layout_64, *params["dec_conv0"], padding=1, relu=True)   # i = 0
    l = pixel_shuffle(l, 2)                                             # i = 1,2
    l = resnet_block_withshort(
        jnp.concatenate([x_sm_128, l], axis=-1), params["dec_rb1"])     # i = 3
    layout_forrecon = l
    l = conv2d(l, *params["dec_conv4"], padding=1, relu=True)           # i = 4
    l = pixel_shuffle(l, 2)                                             # i = 5,6
    layout_256 = resnet_block_withshort(
        jnp.concatenate([x_sm_256, l], axis=-1), params["dec_rb2"])     # i = 7

    feature_recon_128 = conv2d(layout_forrecon,
                               *params["feature_mapping_128"], padding=0)
    feature_recon_256 = conv2d(layout_256,
                               *params["feature_mapping_256"], padding=0)

    return [to_nchw(feature_recon_256),
            to_nchw(feature_recon_128),
            to_nchw(feature_recon_64)]


# ----------------------------------------------------------------------------
# Demo
# ----------------------------------------------------------------------------

if __name__ == "__main__":
    B, C, H, W = 2, 3, 32, 32
    key = jax.random.PRNGKey(0)
    k1, k2, k3 = jax.random.split(key, 3)

    x = jax.random.normal(k1, (B, C, H, W), jnp.float32)
    mask = (jax.random.uniform(k2, (B, 1, H, W)) < 0.5).astype(jnp.float32)
    mask_512 = (jax.random.uniform(k3, (B, 1, H, W)) < 0.5).astype(jnp.float32)
    masked_512 = x * (1.0 - mask_512)

    params = build_params(input_channels=C)

    outs = map_r_forward(params, x, mask, masked_512, mask_512)
    outs = [jax.block_until_ready(o) for o in outs]

    # sanity on shapes (NCHW): [(B,76,H/2,W/2), (B,76,H/4,W/4), (B,152,H/8,W/8)]
    assert outs[0].shape == (B, 76, H // 2, W // 2)
    assert outs[1].shape == (B, 76, H // 4, W // 4)
    assert outs[2].shape == (B, 152, H // 8, W // 8)
    assert all(bool(jnp.all(jnp.isfinite(o))) for o in outs)

    print("KERNEL_OK")
</pallas_src>

<mosaic_0001>
module attributes {stable_mosaic.version = 11 : i64} {
  func.func @kernel(%arg0: i32, %arg1: memref<512x196xbf16, #tpu.memory_space<vmem>>, %arg2: memref<196x64xbf16, #tpu.memory_space<vmem>>, %arg3: memref<1x64xf32, #tpu.memory_space<vmem>>, %arg4: memref<512x64xf32, #tpu.memory_space<vmem>>) attributes {dimension_semantics = [#tpu.dimension_semantics<parallel>], iteration_bounds = array<i64: 4>, scalar_prefetch = 0 : i64, scratch_operands = 0 : i64, tpu.core_type = #tpu.core_type<tc>, window_params = [{transform_indices = @transform_0, window_bounds = array<i64: 512, 196>}, {pipeline_mode = #tpu.pipeline_mode<synchronous>, transform_indices = @transform_1, window_bounds = array<i64: 196, 64>}, {pipeline_mode = #tpu.pipeline_mode<synchronous>, transform_indices = @transform_2, window_bounds = array<i64: 1, 64>}, {transform_indices = @transform_3, window_bounds = array<i64: 512, 64>}]} {
    %c0 = arith.constant 0 : index
    %c0_0 = arith.constant 0 : index
    %0 = vector.load %arg1[%c0, %c0_0] : memref<512x196xbf16, #tpu.memory_space<vmem>>, vector<512x196xbf16>
    %c0_1 = arith.constant 0 : index
    %c0_2 = arith.constant 0 : index
    %1 = vector.load %arg2[%c0_1, %c0_2] : memref<196x64xbf16, #tpu.memory_space<vmem>>, vector<196x64xbf16>
    %cst = arith.constant dense<0.000000e+00> : vector<512x64xf32>
    %2 = tpu.matmul %0, %1, %cst {dimension_numbers = #tpu.dot_dimension_numbers<[1], [0], [0], [1], [0, 0, 1, 1], [], []>} : vector<512x196xbf16>, vector<196x64xbf16>, vector<512x64xf32> -> vector<512x64xf32>
    %c0_3 = arith.constant 0 : index
    %c0_4 = arith.constant 0 : index
    %3 = vector.load %arg3[%c0_3, %c0_4] : memref<1x64xf32, #tpu.memory_space<vmem>>, vector<1x64xf32>
    %4 = vector.broadcast %3 : vector<1x64xf32> to vector<512x64xf32>
    %5 = arith.addf %2, %4 : vector<512x64xf32>
    %cst_5 = arith.constant 0.000000e+00 : f32
    %6 = vector.broadcast %cst_5 : f32 to vector<512x64xf32>
    %7 = arith.maximumf %5, %6 : vector<512x64xf32>
    %c0_6 = arith.constant 0 : index
    %c0_7 = arith.constant 0 : index
    %8 = vector.load %arg4[%c0_6, %c0_7] : memref<512x64xf32, #tpu.memory_space<vmem>>, vector<512x64xf32>
    tpu.vector_store %arg4[%c0_6, %c0_7], %7 {strides = array<i32>} : memref<512x64xf32, #tpu.memory_space<vmem>>, vector<512x64xf32>,
    return
  }
  func.func @transform_0(%arg0: i32) -> (i32, i32) {
    %c0_i32 = arith.constant 0 : i32
    %c0_i32_0 = arith.constant 0 : i32
    return %arg0, %c0_i32 : i32, i32
  }
  func.func @transform_1(%arg0: i32) -> (i32, i32) {
    %c0_i32 = arith.constant 0 : i32
    %c0_i32_0 = arith.constant 0 : i32
    %c0_i32_1 = arith.constant 0 : i32
    return %c0_i32, %c0_i32_0 : i32, i32
  }
  func.func @transform_2(%arg0: i32) -> (i32, i32) {
    %c0_i32 = arith.constant 0 : i32
    %c0_i32_0 = arith.constant 0 : i32
    %c0_i32_1 = arith.constant 0 : i32
    return %c0_i32, %c0_i32_0 : i32, i32
  }
  func.func @transform_3(%arg0: i32) -> (i32, i32) {
    %c0_i32 = arith.constant 0 : i32
    %c0_i32_0 = arith.constant 0 : i32
    return %arg0, %c0_i32 : i32, i32
  }
}

</mosaic_0001>

<llo_original>
// kernel: tpu_custom_call.1
$region0: #{tpu_custom_call.1}
  #allocation0 [shape = 'u32[]', space=smem, size = 0x4, offset = 0x4, fixed_abs, tag = 'smem constant byte address 0x4 - core index']
  #allocation1 [shape = 'u32[144,128]{1,0:T(1,128)}', space=vmem, size = 0x12000, scoped, tag = 'internal scratch']
  %s0 = inlined_call_operand.vmem [shape: bf16[2048,196], index: 0, kind: input, shape index: {}]
  %s1 = inlined_call_operand.vmem [shape: bf16[196,64], index: 1, kind: input, shape index: {}]
  %s2 = inlined_call_operand.vmem [shape: f32[1,64], index: 2, kind: input, shape index: {}]
  %s3 = inlined_call_operand.vmem [shape: f32[2048,64], index: 3, kind: output, shape index: {}]
  %s4 = sld [smem:[#allocation0]]
  $region45: #{tpu_custom_call.1} parent=0
    _
  %s6 = ssub.s32 1, %s4
  %s7 = scalar_select 0, %s6, %s4
  loop: start=0, step=1, limit=6
  $region2: #{tpu_custom_call.1} parent=0 // loop_pre_header
    _
  $region3: #{tpu_custom_call.1} parent=0 // loop_header
    %s9 = sphi 0, %s13
    %p10 = scmp.ge.s32.totalorder %s9, 6
    %s19 = sphi 0, %s21
    %s22 = sphi 0, %s19
    %s23 = sphi 0, %s22
    %s39 = sphi 0, %s23
    %s43 = sphi 0, %s43
    %s45 = sphi 0, %s43
    %s46 = sphi 0, %s45
    %s60 = sphi 0, %s46
    %s64 = sphi 0, %s64
    %s66 = sphi 0, %s64
    %s67 = sphi 0, %s66
    %s81 = sphi 0, %s67
    %s87 = sphi 0, %s89
    %s90 = sphi 0, %s87
    %s91 = sphi 0, %s90
    %s107 = sphi 0, %s91
  $region4: #{tpu_custom_call.1} parent=0 // loop_header_branch
    %12 = sbr.rel (%p10) target = $region8
  $region5: #{tpu_custom_call.1} parent=0 // loop_body
    %s14 = ssub.s32 %s9, 1
    %s15 = ssub.s32 %s9, 2
    %s16 = sadd.s32 %s9, 1
    %s17 = ssub.s32 %s9, %s16
    %p18 = scmp.eq.s32.totalorder %s17, 0
    %s20 = sadd.s32 %s19, 1
    %s21 = scalar_select %p18, %s19, %s20
    %p24 = pneg %p18
    %p25 = scmp.eq.s32.totalorder %s9, 3
    %p26 = por %p24, %p25
    %p27 = scmp.ne.s32.totalorder %s19, %s22
    %p28 = scmp.eq.s32.totalorder %s9, 0
    %p29 = por %p27, %p28
    %p30 = scmp.ne.s32.totalorder %s19, %s22
    %p31 = scmp.eq.s32.totalorder %s14, 3
    %p32 = por %p30, %p31
    %p33 = scmp.ne.s32.totalorder %s22, %s23
    %p34 = scmp.eq.s32.totalorder %s14, 0
    %p35 = por %p33, %p34
    %p36 = scmp.ne.s32.totalorder %s22, %s23
    %p37 = scmp.eq.s32.totalorder %s15, 3
    %p38 = por %p36, %p37
    %p40 = scmp.ne.s32.totalorder %s23, %s39
    %p41 = scmp.eq.s32.totalorder %s15, 0
    %p42 = por %p40, %p41
    %s44 = sadd.s32 %s43, 1
    %p47 = scmp.eq.s32.totalorder %s9, 3
    %p48 = scmp.ne.s32.totalorder %s43, %s45
    %p49 = scmp.eq.s32.totalorder %s9, 0
    %p50 = por %p48, %p49
    %p51 = scmp.ne.s32.totalorder %s43, %s45
    %p52 = scmp.eq.s32.totalorder %s14, 3
    %p53 = por %p51, %p52
    %p54 = scmp.ne.s32.totalorder %s45, %s46
    %p55 = scmp.eq.s32.totalorder %s14, 0
    %p56 = por %p54, %p55
    %p57 = scmp.ne.s32.totalorder %s45, %s46
    %p58 = scmp.eq.s32.totalorder %s15, 3
    %p59 = por %p57, %p58
    %p61 = scmp.ne.s32.totalorder %s46, %s60
    %p62 = scmp.eq.s32.totalorder %s15, 0
    %p63 = por %p61, %p62
    %s65 = sadd.s32 %s64, 1
    %p68 = scmp.eq.s32.totalorder %s9, 3
    %p69 = scmp.ne.s32.totalorder %s64, %s66
    %p70 = scmp.eq.s32.totalorder %s9, 0
    %p71 = por %p69, %p70
    %p72 = scmp.ne.s32.totalorder %s64, %s66
    %p73 = scmp.eq.s32.totalorder %s14, 3
    %p74 = por %p72, %p73
    %p75 = scmp.ne.s32.totalorder %s66, %s67
    %p76 = scmp.eq.s32.totalorder %s14, 0
    %p77 = por %p75, %p76
    %p78 = scmp.ne.s32.totalorder %s66, %s67
    %p79 = scmp.eq.s32.totalorder %s15, 3
    %p80 = por %p78, %p79
    %p82 = scmp.ne.s32.totalorder %s67, %s81
    %p83 = scmp.eq.s32.totalorder %s15, 0
    %p84 = por %p82, %p83
    %s85 = ssub.s32 %s9, %s16
    %p86 = scmp.eq.s32.totalorder %s85, 0
    %s88 = sadd.s32 %s87, 1
    %s89 = scalar_select %p86, %s87, %s88
    %p92 = pneg %p86
    %p93 = scmp.eq.s32.totalorder %s9, 3
    %p94 = por %p92, %p93
    %p95 = scmp.ne.s32.totalorder %s87, %s90
    %p96 = scmp.eq.s32.totalorder %s9, 0
    %p97 = por %p95, %p96
    %p98 = scmp.ne.s32.totalorder %s87, %s90
    %p99 = scmp.eq.s32.totalorder %s14, 3
    %p100 = por %p98, %p99
    %p101 = scmp.ne.s32.totalorder %s90, %s91
    %p102 = scmp.eq.s32.totalorder %s14, 0
    %p103 = por %p101, %p102
    %p104 = scmp.ne.s32.totalorder %s90, %s91
    %p105 = scmp.eq.s32.totalorder %s15, 3
    %p106 = por %p104, %p105
    %p108 = scmp.ne.s32.totalorder %s91, %s107
    %p109 = scmp.eq.s32.totalorder %s15, 0
    %p110 = por %p108, %p109
    %p111 = scmp.le.s32.totalorder 1, %s9
    %p112 = scmp.lt.s32.totalorder %s9, 5
    %p113 = pnand %p111, %p112
    %p114 = pneg %p113
    // Predicated region
    $region9: #{tpu_custom_call.1} parent=5 // pred_check
      _
    $region10: #{tpu_custom_call.1} parent=5 // pred_check_branch
      %116 = sbr.rel (%p113) target = $region12
    $region11: #{tpu_custom_call.1} parent=5 // pred_region
      %s117 = ssub.s32 %s9, 1
      // Predicated region
      $region13: #{tpu_custom_call.1} parent=11 // pred_check
        %p118 = pneg %p56
      $region14: #{tpu_custom_call.1} parent=11 // pred_check_branch
        %120 = sbr.rel (%p118) target = $region16
      $region15: #{tpu_custom_call.1} parent=11 // pred_region
        _
      $region16: #{tpu_custom_call.1} parent=11 // pred_fallthru
        _
      // Predicated region
      $region17: #{tpu_custom_call.1} parent=11 // pred_check
        %p121 = pneg %p77
      $region18: #{tpu_custom_call.1} parent=11 // pred_check_branch
        %123 = sbr.rel (%p121) target = $region20
      $region19: #{tpu_custom_call.1} parent=11 // pred_region
        _
      $region20: #{tpu_custom_call.1} parent=11 // pred_fallthru
        _
    $region12: #{tpu_custom_call.1} parent=5 // pred_fallthru
      _
    %p124 = scmp.lt.s32.totalorder %s9, 4
    // Predicated region
    $region21: #{tpu_custom_call.1} parent=5 // pred_check
      %p125 = pneg %p124
    $region22: #{tpu_custom_call.1} parent=5 // pred_check_branch
      %127 = sbr.rel (%p125) target = $region24
    $region23: #{tpu_custom_call.1} parent=5 // pred_region
      // Predicated region
      $region25: #{tpu_custom_call.1} parent=23 // pred_check
        %p128 = pneg %p29
      $region26: #{tpu_custom_call.1} parent=23 // pred_check_branch
        %130 = sbr.rel (%p128) target = $region28
      $region27: #{tpu_custom_call.1} parent=23 // pred_region
        %s131 = smul.u32 64, %s9
        %p132 = scmp.lt.s32.totalorder %s131, 255
        %s133 = scalar_select %p132, %s131, 255
        %s134 = smul.addr %s133, 2
        %s135 = smul.addr %s134, 4
        %s136 = scalar_lea.vmem %s0, %s135
        %s137 = smul.u32 64, %s9
      $region28: #{tpu_custom_call.1} parent=23 // pred_fallthru
        _
    $region24: #{tpu_custom_call.1} parent=5 // pred_fallthru
      _
    %p138 = scmp.le.s32.totalorder 1, %s9
    %p139 = scmp.lt.s32.totalorder %s9, 5
    %p140 = pnand %p138, %p139
    %p141 = pneg %p140
    // Predicated region
    $region29: #{tpu_custom_call.1} parent=5 // pred_check
      _
    $region30: #{tpu_custom_call.1} parent=5 // pred_check_branch
      %143 = sbr.rel (%p140) target = $region32
    $region31: #{tpu_custom_call.1} parent=5 // pred_region
      %s144 = ssub.s32 %s9, 1
      %s145 = smul.u32 64, %s14
      %p146 = scmp.lt.s32.totalorder %s145, 255
      %s147 = scalar_select %p146, %s145, 255
      %s148 = smul.addr %s147, 2
      %s149 = smul.addr %s148, 4
      %s150 = scalar_lea.vmem %s0, %s149
      %p151 = pneg %p35
      %p152 = pneg %p32
      %p153 = pneg %p56
      %p154 = pneg %p53
      %p155 = pneg %p77
      %p156 = pneg %p74
      %p157 = pneg %p103
      %p158 = pneg %p100
      %s159 = smul.u32 64, %s14
      %p160 = scmp.lt.s32.totalorder %s159, 255
      %s161 = scalar_select %p160, %s159, 255
      %s162 = smul.addr %s161, 8
      %s163 = scalar_lea.vmem %s3, %s162
      %s164 = smul.u32 64, %s14
      %p165 = scmp.lt.s32.totalorder %s164, 255
      %s166 = scalar_select %p165, %s164, 255
      %s167 = smul.addr %s166, 2
      %s168 = smul.addr %s167, 4
      %s169 = scalar_lea.vmem %s0, %s168
      %s170 = smul.u32 64, %s14
      %s171 = smul.u32 64, %s14
      %p172 = scmp.lt.s32.totalorder %s171, 255
      %s173 = scalar_select %p172, %s171, 255
      %s174 = smul.addr %s173, 8
      %s175 = scalar_lea.vmem %s3, %s174
      %s176 = smul.u32 64, %s14
      %v178 = vld [vmem:[%s169] sm:$0xff]
      %v179 = vld [vmem:[%s169 + $0x8] sm:$0xff]
      %v180 = vld [vmem:[%s169 + $0x10] sm:$0xff]
      %v181 = vld [vmem:[%s169 + $0x18] sm:$0xff]
      %v182 = vld [vmem:[%s169 + $0x20] sm:$0xff]
      %v183 = vld [vmem:[%s169 + $0x28] sm:$0xff]
      %v184 = vld [vmem:[%s169 + $0x30] sm:$0xff]
      %v185 = vld [vmem:[%s169 + $0x38] sm:$0xff]
      %v186 = vld [vmem:[%s169 + $0x40] sm:$0xff]
      %v187 = vld [vmem:[%s169 + $0x48] sm:$0xff]
      %v188 = vld [vmem:[%s169 + $0x50] sm:$0xff]
      %v189 = vld [vmem:[%s169 + $0x58] sm:$0xff]
      %v190 = vld [vmem:[%s169 + $0x60] sm:$0xff]
      %v191 = vld [vmem:[%s169 + $0x68] sm:$0xff]
      %v192 = vld [vmem:[%s169 + $0x70] sm:$0xff]
      %v193 = vld [vmem:[%s169 + $0x78] sm:$0xff]
      %v194 = vld [vmem:[%s169 + $0x80] sm:$0xff]
      %v195 = vld [vmem:[%s169 + $0x88] sm:$0xff]
      %v196 = vld [vmem:[%s169 + $0x90] sm:$0xff]
      %v197 = vld [vmem:[%s169 + $0x98] sm:$0xff]
      %v198 = vld [vmem:[%s169 + $0xa0] sm:$0xff]
      %v199 = vld [vmem:[%s169 + $0xa8] sm:$0xff]
      %v200 = vld [vmem:[%s169 + $0xb0] sm:$0xff]
      %v201 = vld [vmem:[%s169 + $0xb8] sm:$0xff]
      %v202 = vld [vmem:[%s169 + $0xc0] sm:$0xff]
      %v203 = vld [vmem:[%s169 + $0xc8] sm:$0xff]
      %v204 = vld [vmem:[%s169 + $0xd0] sm:$0xff]
      %v205 = vld [vmem:[%s169 + $0xd8] sm:$0xff]
      %v206 = vld [vmem:[%s169 + $0xe0] sm:$0xff]
      %v207 = vld [vmem:[%s169 + $0xe8] sm:$0xff]
      %v208 = vld [vmem:[%s169 + $0xf0] sm:$0xff]
      %v209 = vld [vmem:[%s169 + $0xf8] sm:$0xff]
      %v210 = vld [vmem:[%s169 + $0x100] sm:$0xff]
      %v211 = vld [vmem:[%s169 + $0x108] sm:$0xff]
      %v212 = vld [vmem:[%s169 + $0x110] sm:$0xff]
      %v213 = vld [vmem:[%s169 + $0x118] sm:$0xff]
      %v214 = vld [vmem:[%s169 + $0x120] sm:$0xff]
      %v215 = vld [vmem:[%s169 + $0x128] sm:$0xff]
      %v216 = vld [vmem:[%s169 + $0x130] sm:$0xff]
      %v217 = vld [vmem:[%s169 + $0x138] sm:$0xff]
      %v218 = vld [vmem:[%s169 + $0x140] sm:$0xff]
      %v219 = vld [vmem:[%s169 + $0x148] sm:$0xff]
      %v220 = vld [vmem:[%s169 + $0x150] sm:$0xff]
      %v221 = vld [vmem:[%s169 + $0x158] sm:$0xff]
      %v222 = vld [vmem:[%s169 + $0x160] sm:$0xff]
      %v223 = vld [vmem:[%s169 + $0x168] sm:$0xff]
      %v224 = vld [vmem:[%s169 + $0x170] sm:$0xff]
      %v225 = vld [vmem:[%s169 + $0x178] sm:$0xff]
      %v226 = vld [vmem:[%s169 + $0x180] sm:$0xff]
      %v227 = vld [vmem:[%s169 + $0x188] sm:$0xff]
      %v228 = vld [vmem:[%s169 + $0x190] sm:$0xff]
      %v229 = vld [vmem:[%s169 + $0x198] sm:$0xff]
      %v230 = vld [vmem:[%s169 + $0x1a0] sm:$0xff]
      %v231 = vld [vmem:[%s169 + $0x1a8] sm:$0xff]
      %v232 = vld [vmem:[%s169 + $0x1b0] sm:$0xff]
      %v233 = vld [vmem:[%s169 + $0x1b8] sm:$0xff]
      %v234 = vld [vmem:[%s169 + $0x1c0] sm:$0xff]
      %v235 = vld [vmem:[%s169 + $0x1c8] sm:$0xff]
      %v236 = vld [vmem:[%s169 + $0x1d0] sm:$0xff]
      %v237 = vld [vmem:[%s169 + $0x1d8] sm:$0xff]
      %v238 = vld [vmem:[%s169 + $0x1e0] sm:$0xff]
      %v239 = vld [vmem:[%s169 + $0x1e8] sm:$0xff]
      %v240 = vld [vmem:[%s169 + $0x1f0] sm:$0xff]
      %v241 = vld [vmem:[%s169 + $0x1f8] sm:$0xff]
      %v242 = vld [vmem:[%s1] sm:$0xf]
      %v243 = vld [vmem:[%s1 + $0x4] sm:$0xf]
      %v244 = vld [vmem:[%s1 + $0x8] sm:$0xf]
      %v245 = vld [vmem:[%s1 + $0xc] sm:$0xf]
      %v246 = vld [vmem:[%s1 + $0x10] sm:$0xf]
      %v247 = vld [vmem:[%s1 + $0x14] sm:$0xf]
      %v248 = vld [vmem:[%s1 + $0x18] sm:$0xf]
      %v249 = vld [vmem:[%s1 + $0x1c] sm:$0xf]
      %v250 = vld [vmem:[%s1 + $0x20] sm:$0xf]
      %v251 = vld [vmem:[%s1 + $0x24] sm:$0xf]
      %v252 = vld [vmem:[%s1 + $0x28] sm:$0xf]
      %v253 = vld [vmem:[%s1 + $0x2c] sm:$0xf]
      %v254 = vld [vmem:[%s1 + $0x30] sm:$0xf]
      %v255 = vld [vmem:[%s1 + $0x34] sm:$0xf]
      %v256 = vld [vmem:[%s1 + $0x38] sm:$0xf]
      %v257 = vld [vmem:[%s1 + $0x3c] sm:$0xf]
      %v258 = vld [vmem:[%s1 + $0x40] sm:$0xf]
      %v259 = vld [vmem:[%s1 + $0x44] sm:$0xf]
      %v260 = vld [vmem:[%s1 + $0x48] sm:$0xf]
      %v261 = vld [vmem:[%s1 + $0x4c] sm:$0xf]
      %v262 = vld [vmem:[%s1 + $0x50] sm:$0xf]
      %v263 = vld [vmem:[%s1 + $0x54] sm:$0xf]
      %v264 = vld [vmem:[%s1 + $0x58] sm:$0xf]
      %v265 = vld [vmem:[%s1 + $0x5c] sm:$0xf]
      %v266 = vld [vmem:[%s1 + $0x60] sm:$0x3]
      %v267 = vld [vmem:[%s2] sm:$0x1]
      %v269 = vlaneseq
      %v270 = vshrl.u32 %v269, 7
      %v271 = vsub.s32 0, %v270
      %v272 = vrot.slane %v267, %v271
      %v338 = vunpack.c.l.b16 %v178
      %v339 = vunpack.c.h.b16 %v178
      %v340 = vunpack.c.l.b16 %v179
      %v341 = vunpack.c.h.b16 %v179
      %v342 = vunpack.c.l.b16 %v180
      %v343 = vunpack.c.h.b16 %v180
      %v344 = vunpack.c.l.b16 %v181
      %v345 = vunpack.c.h.b16 %v181
      %v346 = vunpack.c.l.b16 %v182
      %v347 = vunpack.c.h.b16 %v182
      %v348 = vunpack.c.l.b16 %v183
      %v349 = vunpack.c.h.b16 %v183
      %v350 = vunpack.c.l.b16 %v184
      %v351 = vunpack.c.h.b16 %v184
      %v352 = vunpack.c.l.b16 %v185
      %v353 = vunpack.c.h.b16 %v185
      %v354 = vunpack.c.l.b16 %v186
      %v355 = vunpack.c.h.b16 %v186
      %v356 = vunpack.c.l.b16 %v187
      %v357 = vunpack.c.h.b16 %v187
      %v358 = vunpack.c.l.b16 %v188
      %v359 = vunpack.c.h.b16 %v188
      %v360 = vunpack.c.l.b16 %v189
      %v361 = vunpack.c.h.b16 %v189
      %v362 = vunpack.c.l.b16 %v190
      %v363 = vunpack.c.h.b16 %v190
      %v364 = vunpack.c.l.b16 %v191
      %v365 = vunpack.c.h.b16 %v191
      %v366 = vunpack.c.l.b16 %v192
      %v367 = vunpack.c.h.b16 %v192
      %v368 = vunpack.c.l.b16 %v193
      %v369 = vunpack.c.h.b16 %v193
      %v370 = vunpack.c.l.b16 %v194
      %v371 = vunpack.c.h.b16 %v194
      %v372 = vunpack.c.l.b16 %v195
      %v373 = vunpack.c.h.b16 %v195
      %v374 = vunpack.c.l.b16 %v196
      %v375 = vunpack.c.h.b16 %v196
      %v376 = vunpack.c.l.b16 %v197
      %v377 = vunpack.c.h.b16 %v197
      %v378 = vunpack.c.l.b16 %v198
      %v379 = vunpack.c.h.b16 %v198
      %v380 = vunpack.c.l.b16 %v199
      %v381 = vunpack.c.h.b16 %v199
      %v382 = vunpack.c.l.b16 %v200
      %v383 = vunpack.c.h.b16 %v200
      %v384 = vunpack.c.l.b16 %v201
      %v385 = vunpack.c.h.b16 %v201
      %v386 = vunpack.c.l.b16 %v202
      %v387 = vunpack.c.h.b16 %v202
      %v388 = vunpack.c.l.b16 %v203
      %v389 = vunpack.c.h.b16 %v203
      %v390 = vunpack.c.l.b16 %v204
      %v391 = vunpack.c.h.b16 %v204
      %v392 = vunpack.c.l.b16 %v205
      %v393 = vunpack.c.h.b16 %v205
      %v394 = vunpack.c.l.b16 %v206
      %v395 = vunpack.c.h.b16 %v206
      %v396 = vunpack.c.l.b16 %v207
      %v397 = vunpack.c.h.b16 %v207
      %v398 = vunpack.c.l.b16 %v208
      %v399 = vunpack.c.h.b16 %v208
      %v400 = vunpack.c.l.b16 %v209
      %v401 = vunpack.c.h.b16 %v209
      %v402 = vunpack.c.l.b16 %v210
      %v403 = vunpack.c.h.b16 %v210
      %v404 = vunpack.c.l.b16 %v211
      %v405 = vunpack.c.h.b16 %v211
      %v406 = vunpack.c.l.b16 %v212
      %v407 = vunpack.c.h.b16 %v212
      %v408 = vunpack.c.l.b16 %v213
      %v409 = vunpack.c.h.b16 %v213
      %v410 = vunpack.c.l.b16 %v214
      %v411 = vunpack.c.h.b16 %v214
      %v412 = vunpack.c.l.b16 %v215
      %v413 = vunpack.c.h.b16 %v215
      %v414 = vunpack.c.l.b16 %v216
      %v415 = vunpack.c.h.b16 %v216
      %v416 = vunpack.c.l.b16 %v217
      %v417 = vunpack.c.h.b16 %v217
      %v418 = vunpack.c.l.b16 %v218
      %v419 = vunpack.c.h.b16 %v218
      %v420 = vunpack.c.l.b16 %v219
      %v421 = vunpack.c.h.b16 %v219
      %v422 = vunpack.c.l.b16 %v220
      %v423 = vunpack.c.h.b16 %v220
      %v424 = vunpack.c.l.b16 %v221
      %v425 = vunpack.c.h.b16 %v221
      %v426 = vunpack.c.l.b16 %v222
      %v427 = vunpack.c.h.b16 %v222
      %v428 = vunpack.c.l.b16 %v223
      %v429 = vunpack.c.h.b16 %v223
      %v430 = vunpack.c.l.b16 %v224
      %v431 = vunpack.c.h.b16 %v224
      %v432 = vunpack.c.l.b16 %v225
      %v433 = vunpack.c.h.b16 %v225
      %v434 = vunpack.c.l.b16 %v226
      %v435 = vunpack.c.h.b16 %v226
      %v436 = vunpack.c.l.b16 %v227
      %v437 = vunpack.c.h.b16 %v227
      %v438 = vunpack.c.l.b16 %v228
      %v439 = vunpack.c.h.b16 %v228
      %v440 = vunpack.c.l.b16 %v229
      %v441 = vunpack.c.h.b16 %v229
      %v442 = vunpack.c.l.b16 %v230
      %v443 = vunpack.c.h.b16 %v230
      %v444 = vunpack.c.l.b16 %v231
      %v445 = vunpack.c.h.b16 %v231
      %v446 = vunpack.c.l.b16 %v232
      %v447 = vunpack.c.h.b16 %v232
      %v448 = vunpack.c.l.b16 %v233
      %v449 = vunpack.c.h.b16 %v233
      %v450 = vunpack.c.l.b16 %v234
      %v451 = vunpack.c.h.b16 %v234
      %v452 = vunpack.c.l.b16 %v235
      %v453 = vunpack.c.h.b16 %v235
      %v454 = vunpack.c.l.b16 %v236
      %v455 = vunpack.c.h.b16 %v236
      %v456 = vunpack.c.l.b16 %v237
      %v457 = vunpack.c.h.b16 %v237
      %v458 = vunpack.c.l.b16 %v238
      %v459 = vunpack.c.h.b16 %v238
      %v460 = vunpack.c.l.b16 %v239
      %v461 = vunpack.c.h.b16 %v239
      %v462 = vunpack.c.l.b16 %v240
      %v463 = vunpack.c.h.b16 %v240
      %v464 = vunpack.c.l.b16 %v241
      %v465 = vunpack.c.h.b16 %v241
      %v466 = vpack.c.b16 %v340, %v338
      %v467 = vpack.c.b16 %v341, %v339
      %v468 = vpack.c.b16 %v344, %v342
      %v469 = vpack.c.b16 %v345, %v343
      %v470 = vpack.c.b16 %v348, %v346
      %v471 = vpack.c.b16 %v349, %v347
      %v472 = vpack.c.b16 %v352, %v350
      %v473 = vpack.c.b16 %v353, %v351
      %v474 = vpack.c.b16 %v356, %v354
      %v475 = vpack.c.b16 %v357, %v355
      %v476 = vpack.c.b16 %v360, %v358
      %v477 = vpack.c.b16 %v361, %v359
      %v478 = vpack.c.b16 %v364, %v362
      %v479 = vpack.c.b16 %v365, %v363
      %v480 = vpack.c.b16 %v368, %v366
      %v481 = vpack.c.b16 %v369, %v367
      %v482 = vpack.c.b16 %v372, %v370
      %v483 = vpack.c.b16 %v373, %v371
      %v484 = vpack.c.b16 %v376, %v374
      %v485 = vpack.c.b16 %v377, %v375
      %v486 = vpack.c.b16 %v380, %v378
      %v487 = vpack.c.b16 %v381, %v379
      %v488 = vpack.c.b16 %v384, %v382
      %v489 = vpack.c.b16 %v385, %v383
      %v490 = vpack.c.b16 %v388, %v386
      %v491 = vpack.c.b16 %v389, %v387
      %v492 = vpack.c.b16 %v392, %v390
      %v493 = vpack.c.b16 %v393, %v391
      %v494 = vpack.c.b16 %v396, %v394
      %v495 = vpack.c.b16 %v397, %v395
      %v496 = vpack.c.b16 %v400, %v398
      %v497 = vpack.c.b16 %v401, %v399
      %v498 = vpack.c.b16 %v404, %v402
      %v499 = vpack.c.b16 %v405, %v403
      %v500 = vpack.c.b16 %v408, %v406
      %v501 = vpack.c.b16 %v409, %v407
      %v502 = vpack.c.b16 %v412, %v410
      %v503 = vpack.c.b16 %v413, %v411
      %v504 = vpack.c.b16 %v416, %v414
      %v505 = vpack.c.b16 %v417, %v415
      %v506 = vpack.c.b16 %v420, %v418
      %v507 = vpack.c.b16 %v421, %v419
      %v508 = vpack.c.b16 %v424, %v422
      %v509 = vpack.c.b16 %v425, %v423
      %v510 = vpack.c.b16 %v428, %v426
      %v511 = vpack.c.b16 %v429, %v427
      %v512 = vpack.c.b16 %v432, %v430
      %v513 = vpack.c.b16 %v433, %v431
      %v514 = vpack.c.b16 %v436, %v434
      %v515 = vpack.c.b16 %v437, %v435
      %v516 = vpack.c.b16 %v440, %v438
      %v517 = vpack.c.b16 %v441, %v439
      %v518 = vpack.c.b16 %v444, %v442
      %v519 = vpack.c.b16 %v445, %v443
      %v520 = vpack.c.b16 %v448, %v446
      %v521 = vpack.c.b16 %v449, %v447
      %v522 = vpack.c.b16 %v452, %v450
      %v523 = vpack.c.b16 %v453, %v451
      %v524 = vpack.c.b16 %v456, %v454
      %v525 = vpack.c.b16 %v457, %v455
      %v526 = vpack.c.b16 %v460, %v458
      %v527 = vpack.c.b16 %v461, %v459
      %v528 = vpack.c.b16 %v464, %v462
      %v529 = vpack.c.b16 %v465, %v463
      %v587 = vunpack.c.l.b16 %v242
      %v588 = vunpack.c.l.b16 %v243
      %v589 = vunpack.c.l.b16 %v244
      %v590 = vunpack.c.l.b16 %v245
      %v591 = vunpack.c.l.b16 %v246
      %v592 = vunpack.c.l.b16 %v247
      %v593 = vunpack.c.l.b16 %v248
      %v594 = vunpack.c.l.b16 %v249
      %v595 = vunpack.c.l.b16 %v250
      %v596 = vunpack.c.l.b16 %v251
      %v597 = vunpack.c.l.b16 %v252
      %v598 = vunpack.c.l.b16 %v253
      %v599 = vunpack.c.l.b16 %v254
      %v600 = vunpack.c.l.b16 %v255
      %v601 = vunpack.c.l.b16 %v256
      %v602 = vunpack.c.l.b16 %v257
      %v603 = vunpack.c.l.b16 %v258
      %v604 = vunpack.c.l.b16 %v259
      %v605 = vunpack.c.l.b16 %v260
      %v606 = vunpack.c.l.b16 %v261
      %v607 = vunpack.c.l.b16 %v262
      %v608 = vunpack.c.l.b16 %v263
      %v609 = vunpack.c.l.b16 %v264
      %v610 = vunpack.c.l.b16 %v265
      %v611 = vunpack.c.l.b16 %v266
      %v612 = vpack.c.b16 %v588, %v587
      %v613 = vpack.c.b16 %v590, %v589
      %v614 = vpack.c.b16 %v592, %v591
      %v615 = vpack.c.b16 %v594, %v593
      %v616 = vpack.c.b16 %v596, %v595
      %v617 = vpack.c.b16 %v598, %v597
      %v618 = vpack.c.b16 %v600, %v599
      %v619 = vpack.c.b16 %v602, %v601
      %v620 = vpack.c.b16 %v604, %v603
      %v621 = vpack.c.b16 %v606, %v605
      %v622 = vpack.c.b16 %v608, %v607
      %v623 = vpack.c.b16 %v610, %v609
      %v624 = vpack.c.b16 %v611, %v611
      %vm637 = vcmask 556032
      %v639 = vsel %vm637, %v467, 0
      %v642 = vsel %vm637, %v469, 0
      %v645 = vsel %vm637, %v471, 0
      %v648 = vsel %vm637, %v473, 0
      %v651 = vsel %vm637, %v475, 0
      %v654 = vsel %vm637, %v477, 0
      %v657 = vsel %vm637, %v479, 0
      %v660 = vsel %vm637, %v481, 0
      %v663 = vsel %vm637, %v483, 0
      %v666 = vsel %vm637, %v485, 0
      %v669 = vsel %vm637, %v487, 0
      %v672 = vsel %vm637, %v489, 0
      %v675 = vsel %vm637, %v491, 0
      %v678 = vsel %vm637, %v493, 0
      %v681 = vsel %vm637, %v495, 0
      %v684 = vsel %vm637, %v497, 0
      %v687 = vsel %vm637, %v499, 0
      %v690 = vsel %vm637, %v501, 0
      %v693 = vsel %vm637, %v503, 0
      %v696 = vsel %vm637, %v505, 0
      %v699 = vsel %vm637, %v507, 0
      %v702 = vsel %vm637, %v509, 0
      %v705 = vsel %vm637, %v511, 0
      %v708 = vsel %vm637, %v513, 0
      %v711 = vsel %vm637, %v515, 0
      %v714 = vsel %vm637, %v517, 0
      %v717 = vsel %vm637, %v519, 0
      %v720 = vsel %vm637, %v521, 0
      %v723 = vsel %vm637, %v523, 0
      %v726 = vsel %vm637, %v525, 0
      %v729 = vsel %vm637, %v527, 0
      %v732 = vsel %vm637, %v529, 0
      %vm734 = vcmask 1041408
      %v736 = vsel %vm734, %v624, 0
      %738 = vmatprep.subr.bf16.mxu0 0
      %739 = vmatpush1.bf16.msra.mxu0 %v612
      %740 = vmatprep.subr.bf16.mxu0 0
      %741 = vmatpush1.bf16.msra.mxu0 %v613
      %742 = vmatprep.subr.bf16.mxu0 0
      %743 = vmatpush1.bf16.msra.mxu0 %v614
      %744 = vmatprep.subr.bf16.mxu0 0
      %745 = vmatpush1.bf16.msra.mxu0 %v615
      %746 = vmatprep.subr.bf16.mxu0 0
      %747 = vmatpush1.bf16.msra.mxu0 %v616
      %748 = vmatprep.subr.bf16.mxu0 0
      %749 = vmatpush1.bf16.msra.mxu0 %v617
      %750 = vmatprep.subr.bf16.mxu0 0
      %751 = vmatpush1.bf16.msra.mxu0 %v618
      %752 = vmatprep.subr.bf16.mxu0 0
      %753 = vmatpush1.bf16.msra.mxu0 %v619
      %754 = vmatprep.subr.bf16.mxu0 0
      %755 = vmatpush1.bf16.msra.mxu0 %v620
      %756 = vmatprep.subr.bf16.mxu0 0
      %757 = vmatpush1.bf16.msra.mxu0 %v621
      %758 = vmatprep.subr.bf16.mxu0 0
      %759 = vmatpush1.bf16.msra.mxu0 %v622
      %760 = vmatprep.subr.bf16.mxu0 0
      %761 = vmatpush1.bf16.msra.mxu0 %v623
      %762 = vmatprep.subr.bf16.mxu0 0
      %763 = vmatpush1.bf16.msra.mxu0 %v736
      %764 = vmatprep.subr.bf16.mxu0 0
      %765 = vmatpush1.bf16.msra.mxu0 0
      %766 = vmatprep.subr.bf16.mxu0 0
      %767 = vmatpush1.bf16.msra.mxu0 0
      %768 = vmatprep.subr.bf16.mxu0 0
      %769 = vmatpush1.bf16.msra.mxu0 0
      %770 = vmatprep.mubr.bf16.mxu0 %v639
      %771 = vmatmul.mubr.bf16.gmra.mrb[0].mxu0 %v466
      %v772 = vpop.f32.mrb[0].mxu0
      %v773 = vadd.f32 %v272, %v772
      %v774 = vpop.f32.mrb[0].mxu0
      %v775 = vpop.f32.mrb[0].mxu0
      %v776 = vadd.f32 %v272, %v775
      %v777 = vpop.f32.mrb[0].mxu0
      %778 = vmatprep.mubr.bf16.mxu0 %v642
      %779 = vmatmul.mubr.bf16.gmra.mrb[0].mxu0 %v468
      %v780 = vpop.f32.mrb[0].mxu0
      %v781 = vadd.f32 %v272, %v780
      %v782 = vpop.f32.mrb[0].mxu0
      %v783 = vpop.f32.mrb[0].mxu0
      %v784 = vadd.f32 %v272, %v783
      %v785 = vpop.f32.mrb[0].mxu0
      %786 = vmatprep.mubr.bf16.mxu0 %v645
      %787 = vmatmul.mubr.bf16.gmra.mrb[0].mxu0 %v470
      %v788 = vpop.f32.mrb[0].mxu0
      %v789 = vadd.f32 %v272, %v788
      %v790 = vpop.f32.mrb[0].mxu0
      %v791 = vpop.f32.mrb[0].mxu0
      %v792 = vadd.f32 %v272, %v791
      %v793 = vpop.f32.mrb[0].mxu0
      %794 = vmatprep.mubr.bf16.mxu0 %v648
      %795 = vmatmul.mubr.bf16.gmra.mrb[0].mxu0 %v472
      %v796 = vpop.f32.mrb[0].mxu0
      %v797 = vadd.f32 %v272, %v796
      %v798 = vpop.f32.mrb[0].mxu0
      %v799 = vpop.f32.mrb[0].mxu0
      %v800 = vadd.f32 %v272, %v799
      %v801 = vpop.f32.mrb[0].mxu0
      %802 = vmatprep.mubr.bf16.mxu0 %v651
      %803 = vmatmul.mubr.bf16.gmra.mrb[0].mxu0 %v474
      %v804 = vpop.f32.mrb[0].mxu0
      %v805 = vadd.f32 %v272, %v804
      %v806 = vpop.f32.mrb[0].mxu0
      %v807 = vpop.f32.mrb[0].mxu0
      %v808 = vadd.f32 %v272, %v807
      %v809 = vpop.f32.mrb[0].mxu0
      %810 = vmatprep.mubr.bf16.mxu0 %v654
      %811 = vmatmul.mubr.bf16.gmra.mrb[0].mxu0 %v476
      %v812 = vpop.f32.mrb[0].mxu0
      %v813 = vadd.f32 %v272, %v812
      %v814 = vpop.f32.mrb[0].mxu0
      %v815 = vpop.f32.mrb[0].mxu0
      %v816 = vadd.f32 %v272, %v815
      %v817 = vpop.f32.mrb[0].mxu0
      %818 = vmatprep.mubr.bf16.mxu0 %v657
      %819 = vmatmul.mubr.bf16.gmra.mrb[0].mxu0 %v478
      %v820 = vpop.f32.mrb[0].mxu0
      %v821 = vadd.f32 %v272, %v820
      %v822 = vpop.f32.mrb[0].mxu0
      %v823 = vpop.f32.mrb[0].mxu0
      %v824 = vadd.f32 %v272, %v823
      %v825 = vpop.f32.mrb[0].mxu0
      %826 = vmatprep.mubr.bf16.mxu0 %v660
      %827 = vmatmul.mubr.bf16.gmra.mrb[0].mxu0 %v480
      %v828 = vpop.f32.mrb[0].mxu0
      %v829 = vadd.f32 %v272, %v828
      %v830 = vpop.f32.mrb[0].mxu0
      %v831 = vpop.f32.mrb[0].mxu0
      %v832 = vadd.f32 %v272, %v831
      %v833 = vpop.f32.mrb[0].mxu0
      %834 = vmatprep.mubr.bf16.mxu0 %v663
      %835 = vmatmul.mubr.bf16.gmra.mrb[0].mxu0 %v482
      %v836 = vpop.f32.mrb[0].mxu0
      %v837 = vadd.f32 %v272, %v836
      %v838 = vpop.f32.mrb[0].mxu0
      %v839 = vpop.f32.mrb[0].mxu0
      %v840 = vadd.f32 %v272, %v839
      %v841 = vpop.f32.mrb[0].mxu0
      %842 = vmatprep.mubr.bf16.mxu0 %v666
      %843 = vmatmul.mubr.bf16.gmra.mrb[0].mxu0 %v484
      %v844 = vpop.f32.mrb[0].mxu0
      %v845 = vadd.f32 %v272, %v844
      %v846 = vpop.f32.mrb[0].mxu0
      %v847 = vpop.f32.mrb[0].mxu0
      %v848 = vadd.f32 %v272, %v847
      %v849 = vpop.f32.mrb[0].mxu0
      %850 = vmatprep.mubr.bf16.mxu0 %v669
      %851 = vmatmul.mubr.bf16.gmra.mrb[0].mxu0 %v486
      %v852 = vpop.f32.mrb[0].mxu0
      %v853 = vadd.f32 %v272, %v852
      %v854 = vpop.f32.mrb[0].mxu0
      %v855 = vpop.f32.mrb[0].mxu0
      %v856 = vadd.f32 %v272, %v855
      %v857 = vpop.f32.mrb[0].mxu0
      %858 = vmatprep.mubr.bf16.mxu0 %v672
      %859 = vmatmul.mubr.bf16.gmra.mrb[0].mxu0 %v488
      %v860 = vpop.f32.mrb[0].mxu0
      %v861 = vadd.f32 %v272, %v860
      %v862 = vpop.f32.mrb[0].mxu0
      %v863 = vpop.f32.mrb[0].mxu0
      %v864 = vadd.f32 %v272, %v863
      %v865 = vpop.f32.mrb[0].mxu0
      %866 = vmatprep.mubr.bf16.mxu0 %v675
      %867 = vmatmul.mubr.bf16.gmra.mrb[0].mxu0 %v490
      %v868 = vpop.f32.mrb[0].mxu0
      %v869 = vadd.f32 %v272, %v868
      %v870 = vpop.f32.mrb[0].mxu0
      %v871 = vpop.f32.mrb[0].mxu0
      %v872 = vadd.f32 %v272, %v871
      %v873 = vpop.f32.mrb[0].mxu0
      %874 = vmatprep.mubr.bf16.mxu0 %v678
      %875 = vmatmul.mubr.bf16.gmra.mrb[0].mxu0 %v492
      %v876 = vpop.f32.mrb[0].mxu0
      %v877 = vadd.f32 %v272, %v876
      %v878 = vpop.f32.mrb[0].mxu0
      %v879 = vpop.f32.mrb[0].mxu0
      %v880 = vadd.f32 %v272, %v879
      %v881 = vpop.f32.mrb[0].mxu0
      %882 = vmatprep.mubr.bf16.mxu0 %v681
      %883 = vmatmul.mubr.bf16.gmra.mrb[0].mxu0 %v494
      %v884 = vpop.f32.mrb[0].mxu0
      %v885 = vadd.f32 %v272, %v884
      %v886 = vpop.f32.mrb[0].mxu0
      %v887 = vpop.f32.mrb[0].mxu0
      %v888 = vadd.f32 %v272, %v887
      %v889 = vpop.f32.mrb[0].mxu0
      %890 = vmatprep.mubr.bf16.mxu0 %v684
      %891 = vmatmul.mubr.bf16.gmra.mrb[0].mxu0 %v496
      %v892 = vpop.f32.mrb[0].mxu0
      %v893 = vadd.f32 %v272, %v892
      %v894 = vpop.f32.mrb[0].mxu0
      %v895 = vpop.f32.mrb[0].mxu0
      %v896 = vadd.f32 %v272, %v895
      %v897 = vpop.f32.mrb[0].mxu0
      %898 = vmatprep.mubr.bf16.mxu0 %v687
      %899 = vmatmul.mubr.bf16.gmra.mrb[0].mxu0 %v498
      %v900 = vpop.f32.mrb[0].mxu0
      %v901 = vadd.f32 %v272, %v900
      %v902 = vpop.f32.mrb[0].mxu0
      %v903 = vpop.f32.mrb[0].mxu0
      %v904 = vadd.f32 %v272, %v903
      %v905 = vpop.f32.mrb[0].mxu0
      %906 = vmatprep.mubr.bf16.mxu0 %v690
      %907 = vmatmul.mubr.bf16.gmra.mrb[0].mxu0 %v500
      %v908 = vpop.f32.mrb[0].mxu0
      %v909 = vadd.f32 %v272, %v908
      %v910 = vpop.f32.mrb[0].mxu0
      %v911 = vpop.f32.mrb[0].mxu0
      %v912 = vadd.f32 %v272, %v911
      %v913 = vpop.f32.mrb[0].mxu0
      %914 = vmatprep.mubr.bf16.mxu0 %v693
      %915 = vmatmul.mubr.bf16.gmra.mrb[0].mxu0 %v502
      %v916 = vpop.f32.mrb[0].mxu0
      %v917 = vadd.f32 %v272, %v916
      %v918 = vpop.f32.mrb[0].mxu0
      %v919 = vpop.f32.mrb[0].mxu0
      %v920 = vadd.f32 %v272, %v919
      %v921 = vpop.f32.mrb[0].mxu0
      %922 = vmatprep.mubr.bf16.mxu0 %v696
      %923 = vmatmul.mubr.bf16.gmra.mrb[0].mxu0 %v504
      %v924 = vpop.f32.mrb[0].mxu0
      %v925 = vadd.f32 %v272, %v924
      %v926 = vpop.f32.mrb[0].mxu0
      %v927 = vpop.f32.mrb[0].mxu0
      %v928 = vadd.f32 %v272, %v927
      %v929 = vpop.f32.mrb[0].mxu0
      %930 = vmatprep.mubr.bf16.mxu0 %v699
      %931 = vmatmul.mubr.bf16.gmra.mrb[0].mxu0 %v506
      %v932 = vpop.f32.mrb[0].mxu0
      %v933 = vadd.f32 %v272, %v932
      %v934 = vpop.f32.mrb[0].mxu0
      %v935 = vpop.f32.mrb[0].mxu0
      %v936 = vadd.f32 %v272, %v935
      %v937 = vpop.f32.mrb[0].mxu0
      %938 = vmatprep.mubr.bf16.mxu0 %v702
      %939 = vmatmul.mubr.bf16.gmra.mrb[0].mxu0 %v508
      %v940 = vpop.f32.mrb[0].mxu0
      %v941 = vadd.f32 %v272, %v940
      %v942 = vpop.f32.mrb[0].mxu0
      %v943 = vpop.f32.mrb[0].mxu0
      %v944 = vadd.f32 %v272, %v943
      %v945 = vpop.f32.mrb[0].mxu0
      %946 = vmatprep.mubr.bf16.mxu0 %v705
      %947 = vmatmul.mubr.bf16.gmra.mrb[0].mxu0 %v510
      %v948 = vpop.f32.mrb[0].mxu0
      %v949 = vadd.f32 %v272, %v948
      %v950 = vpop.f32.mrb[0].mxu0
      %v951 = vpop.f32.mrb[0].mxu0
      %v952 = vadd.f32 %v272, %v951
      %v953 = vpop.f32.mrb[0].mxu0
      %954 = vmatprep.mubr.bf16.mxu0 %v708
      %955 = vmatmul.mubr.bf16.gmra.mrb[0].mxu0 %v512
      %v956 = vpop.f32.mrb[0].mxu0
      %v957 = vadd.f32 %v272, %v956
      %v958 = vpop.f32.mrb[0].mxu0
      %v959 = vpop.f32.mrb[0].mxu0
      %v960 = vadd.f32 %v272, %v959
      %v961 = vpop.f32.mrb[0].mxu0
      %962 = vmatprep.mubr.bf16.mxu0 %v711
      %963 = vmatmul.mubr.bf16.gmra.mrb[0].mxu0 %v514
      %v964 = vpop.f32.mrb[0].mxu0
      %v965 = vadd.f32 %v272, %v964
      %v966 = vpop.f32.mrb[0].mxu0
      %v967 = vpop.f32.mrb[0].mxu0
      %v968 = vadd.f32 %v272, %v967
      %v969 = vpop.f32.mrb[0].mxu0
      %970 = vmatprep.mubr.bf16.mxu0 %v714
      %971 = vmatmul.mubr.bf16.gmra.mrb[0].mxu0 %v516
      %v972 = vpop.f32.mrb[0].mxu0
      %v973 = vadd.f32 %v272, %v972
      %v974 = vpop.f32.mrb[0].mxu0
      %v975 = vpop.f32.mrb[0].mxu0
      %v976 = vadd.f32 %v272, %v975
      %v977 = vpop.f32.mrb[0].mxu0
      %978 = vmatprep.mubr.bf16.mxu0 %v717
      %979 = vmatmul.mubr.bf16.gmra.mrb[0].mxu0 %v518
      %v980 = vpop.f32.mrb[0].mxu0
      %v981 = vadd.f32 %v272, %v980
      %v982 = vpop.f32.mrb[0].mxu0
      %v983 = vpop.f32.mrb[0].mxu0
      %v984 = vadd.f32 %v272, %v983
      %v985 = vpop.f32.mrb[0].mxu0
      %986 = vmatprep.mubr.bf16.mxu0 %v720
      %987 = vmatmul.mubr.bf16.gmra.mrb[0].mxu0 %v520
      %v988 = vpop.f32.mrb[0].mxu0
      %v989 = vadd.f32 %v272, %v988
      %v990 = vpop.f32.mrb[0].mxu0
      %v991 = vpop.f32.mrb[0].mxu0
      %v992 = vadd.f32 %v272, %v991
      %v993 = vpop.f32.mrb[0].mxu0
      %994 = vmatprep.mubr.bf16.mxu0 %v723
      %995 = vmatmul.mubr.bf16.gmra.mrb[0].mxu0 %v522
      %v996 = vpop.f32.mrb[0].mxu0
      %v997 = vadd.f32 %v272, %v996
      %v998 = vpop.f32.mrb[0].mxu0
      %v999 = vpop.f32.mrb[0].mxu0
      %v1000 = vadd.f32 %v272, %v999
      %v1001 = vpop.f32.mrb[0].mxu0
      %1002 = vmatprep.mubr.bf16.mxu0 %v726
      %1003 = vmatmul.mubr.bf16.gmra.mrb[0].mxu0 %v524
      %v1004 = vpop.f32.mrb[0].mxu0
      %v1005 = vadd.f32 %v272, %v1004
      %v1006 = vpop.f32.mrb[0].mxu0
      %v1007 = vpop.f32.mrb[0].mxu0
      %v1008 = vadd.f32 %v272, %v1007
      %v1009 = vpop.f32.mrb[0].mxu0
      %1010 = vmatprep.mubr.bf16.mxu0 %v729
      %1011 = vmatmul.mubr.bf16.gmra.mrb[0].mxu0 %v526
      %v1012 = vpop.f32.mrb[0].mxu0
      %v1013 = vadd.f32 %v272, %v1012
      %v1014 = vpop.f32.mrb[0].mxu0
      %v1015 = vpop.f32.mrb[0].mxu0
      %v1016 = vadd.f32 %v272, %v1015
      %v1017 = vpop.f32.mrb[0].mxu0
      %1018 = vmatprep.mubr.bf16.mxu0 %v732
      %1019 = vmatmul.mubr.bf16.gmra.mrb[0].mxu0 %v528
      %v1020 = vpop.f32.mrb[0].mxu0
      %v1021 = vadd.f32 %v272, %v1020
      %v1022 = vpop.f32.mrb[0].mxu0
      %v1023 = vpop.f32.mrb[0].mxu0
      %v1024 = vadd.f32 %v272, %v1023
      %v1025 = vpop.f32.mrb[0].mxu0
      %1026 = vdwg.mxu0
      %v1027 = vmax.f32 %v773, 0.0
      %v1028 = vmax.f32 %v776, 0.0
      %v1029 = vmax.f32 %v781, 0.0
      %v1030 = vmax.f32 %v784, 0.0
      %v1031 = vmax.f32 %v789, 0.0
      %v1032 = vmax.f32 %v792, 0.0
      %v1033 = vmax.f32 %v797, 0.0
      %v1034 = vmax.f32 %v800, 0.0
      %v1035 = vmax.f32 %v805, 0.0
      %v1036 = vmax.f32 %v808, 0.0
      %v1037 = vmax.f32 %v813, 0.0
      %v1038 = vmax.f32 %v816, 0.0
      %v1039 = vmax.f32 %v821, 0.0
      %v1040 = vmax.f32 %v824, 0.0
      %v1041 = vmax.f32 %v829, 0.0
      %v1042 = vmax.f32 %v832, 0.0
      %v1043 = vmax.f32 %v837, 0.0
      %v1044 = vmax.f32 %v840, 0.0
      %v1045 = vmax.f32 %v845, 0.0
      %v1046 = vmax.f32 %v848, 0.0
      %v1047 = vmax.f32 %v853, 0.0
      %v1048 = vmax.f32 %v856, 0.0
      %v1049 = vmax.f32 %v861, 0.0
      %v1050 = vmax.f32 %v864, 0.0
      %v1051 = vmax.f32 %v869, 0.0
      %v1052 = vmax.f32 %v872, 0.0
      %v1053 = vmax.f32 %v877, 0.0
      %v1054 = vmax.f32 %v880, 0.0
      %v1055 = vmax.f32 %v885, 0.0
      %v1056 = vmax.f32 %v888, 0.0
      %v1057 = vmax.f32 %v893, 0.0
      %v1058 = vmax.f32 %v896, 0.0
      %v1059 = vmax.f32 %v901, 0.0
      %v1060 = vmax.f32 %v904, 0.0
      %v1061 = vmax.f32 %v909, 0.0
      %v1062 = vmax.f32 %v912, 0.0
      %v1063 = vmax.f32 %v917, 0.0
      %v1064 = vmax.f32 %v920, 0.0
      %v1065 = vmax.f32 %v925, 0.0
      %v1066 = vmax.f32 %v928, 0.0
      %v1067 = vmax.f32 %v933, 0.0
      %v1068 = vmax.f32 %v936, 0.0
      %v1069 = vmax.f32 %v941, 0.0
      %v1070 = vmax.f32 %v944, 0.0
      %v1071 = vmax.f32 %v949, 0.0
      %v1072 = vmax.f32 %v952, 0.0
      %v1073 = vmax.f32 %v957, 0.0
      %v1074 = vmax.f32 %v960, 0.0
      %v1075 = vmax.f32 %v965, 0.0
      %v1076 = vmax.f32 %v968, 0.0
      %v1077 = vmax.f32 %v973, 0.0
      %v1078 = vmax.f32 %v976, 0.0
      %v1079 = vmax.f32 %v981, 0.0
      %v1080 = vmax.f32 %v984, 0.0
      %v1081 = vmax.f32 %v989, 0.0
      %v1082 = vmax.f32 %v992, 0.0
      %v1083 = vmax.f32 %v997, 0.0
      %v1084 = vmax.f32 %v1000, 0.0
      %v1085 = vmax.f32 %v1005, 0.0
      %v1086 = vmax.f32 %v1008, 0.0
      %v1087 = vmax.f32 %v1013, 0.0
      %v1088 = vmax.f32 %v1016, 0.0
      %v1089 = vmax.f32 %v1021, 0.0
      %v1090 = vmax.f32 %v1024, 0.0
      %vm1091 = vcmask 523264
      %1092 = vst.msk [vmem:[%s175] sm:$0xff] %vm1091, %v1027
      %1093 = vst.msk [vmem:[%s175 + $0x8] sm:$0xff] %vm1091, %v1028
      %1094 = vst.msk [vmem:[%s175 + $0x10] sm:$0xff] %vm1091, %v1029
      %1095 = vst.msk [vmem:[%s175 + $0x18] sm:$0xff] %vm1091, %v1030
      %1096 = vst.msk [vmem:[%s175 + $0x20] sm:$0xff] %vm1091, %v1031
      %1097 = vst.msk [vmem:[%s175 + $0x28] sm:$0xff] %vm1091, %v1032
      %1098 = vst.msk [vmem:[%s175 + $0x30] sm:$0xff] %vm1091, %v1033
      %1099 = vst.msk [vmem:[%s175 + $0x38] sm:$0xff] %vm1091, %v1034
      %1100 = vst.msk [vmem:[%s175 + $0x40] sm:$0xff] %vm1091, %v1035
      %1101 = vst.msk [vmem:[%s175 + $0x48] sm:$0xff] %vm1091, %v1036
      %1102 = vst.msk [vmem:[%s175 + $0x50] sm:$0xff] %vm1091, %v1037
      %1103 = vst.msk [vmem:[%s175 + $0x58] sm:$0xff] %vm1091, %v1038
      %1104 = vst.msk [vmem:[%s175 + $0x60] sm:$0xff] %vm1091, %v1039
      %1105 = vst.msk [vmem:[%s175 + $0x68] sm:$0xff] %vm1091, %v1040
      %1106 = vst.msk [vmem:[%s175 + $0x70] sm:$0xff] %vm1091, %v1041
      %1107 = vst.msk [vmem:[%s175 + $0x78] sm:$0xff] %vm1091, %v1042
      %1108 = vst.msk [vmem:[%s175 + $0x80] sm:$0xff] %vm1091, %v1043
      %1109 = vst.msk [vmem:[%s175 + $0x88] sm:$0xff] %vm1091, %v1044
      %1110 = vst.msk [vmem:[%s175 + $0x90] sm:$0xff] %vm1091, %v1045
      %1111 = vst.msk [vmem:[%s175 + $0x98] sm:$0xff] %vm1091, %v1046
      %1112 = vst.msk [vmem:[%s175 + $0xa0] sm:$0xff] %vm1091, %v1047
      %1113 = vst.msk [vmem:[%s175 + $0xa8] sm:$0xff] %vm1091, %v1048
      %1114 = vst.msk [vmem:[%s175 + $0xb0] sm:$0xff] %vm1091, %v1049
      %1115 = vst.msk [vmem:[%s175 + $0xb8] sm:$0xff] %vm1091, %v1050
      %1116 = vst.msk [vmem:[%s175 + $0xc0] sm:$0xff] %vm1091, %v1051
      %1117 = vst.msk [vmem:[%s175 + $0xc8] sm:$0xff] %vm1091, %v1052
      %1118 = vst.msk [vmem:[%s175 + $0xd0] sm:$0xff] %vm1091, %v1053
      %1119 = vst.msk [vmem:[%s175 + $0xd8] sm:$0xff] %vm1091, %v1054
      %1120 = vst.msk [vmem:[%s175 + $0xe0] sm:$0xff] %vm1091, %v1055
      %1121 = vst.msk [vmem:[%s175 + $0xe8] sm:$0xff] %vm1091, %v1056
      %1122 = vst.msk [vmem:[%s175 + $0xf0] sm:$0xff] %vm1091, %v1057
      %1123 = vst.msk [vmem:[%s175 + $0xf8] sm:$0xff] %vm1091, %v1058
      %1124 = vst.msk [vmem:[%s175 + $0x100] sm:$0xff] %vm1091, %v1059
      %1125 = vst.msk [vmem:[%s175 + $0x108] sm:$0xff] %vm1091, %v1060
      %1126 = vst.msk [vmem:[%s175 + $0x110] sm:$0xff] %vm1091, %v1061
      %1127 = vst.msk [vmem:[%s175 + $0x118] sm:$0xff] %vm1091, %v1062
      %1128 = vst.msk [vmem:[%s175 + $0x120] sm:$0xff] %vm1091, %v1063
      %1129 = vst.msk [vmem:[%s175 + $0x128] sm:$0xff] %vm1091, %v1064
      %1130 = vst.msk [vmem:[%s175 + $0x130] sm:$0xff] %vm1091, %v1065
      %1131 = vst.msk [vmem:[%s175 + $0x138] sm:$0xff] %vm1091, %v1066
      %1132 = vst.msk [vmem:[%s175 + $0x140] sm:$0xff] %vm1091, %v1067
      %1133 = vst.msk [vmem:[%s175 + $0x148] sm:$0xff] %vm1091, %v1068
      %1134 = vst.msk [vmem:[%s175 + $0x150] sm:$0xff] %vm1091, %v1069
      %1135 = vst.msk [vmem:[%s175 + $0x158] sm:$0xff] %vm1091, %v1070
      %1136 = vst.msk [vmem:[%s175 + $0x160] sm:$0xff] %vm1091, %v1071
      %1137 = vst.msk [vmem:[%s175 + $0x168] sm:$0xff] %vm1091, %v1072
      %1138 = vst.msk [vmem:[%s175 + $0x170] sm:$0xff] %vm1091, %v1073
      %1139 = vst.msk [vmem:[%s175 + $0x178] sm:$0xff] %vm1091, %v1074
      %1140 = vst.msk [vmem:[%s175 + $0x180] sm:$0xff] %vm1091, %v1075
      %1141 = vst.msk [vmem:[%s175 + $0x188] sm:$0xff] %vm1091, %v1076
      %1142 = vst.msk [vmem:[%s175 + $0x190] sm:$0xff] %vm1091, %v1077
      %1143 = vst.msk [vmem:[%s175 + $0x198] sm:$0xff] %vm1091, %v1078
      %1144 = vst.msk [vmem:[%s175 + $0x1a0] sm:$0xff] %vm1091, %v1079
      %1145 = vst.msk [vmem:[%s175 + $0x1a8] sm:$0xff] %vm1091, %v1080
      %1146 = vst.msk [vmem:[%s175 + $0x1b0] sm:$0xff] %vm1091, %v1081
      %1147 = vst.msk [vmem:[%s175 + $0x1b8] sm:$0xff] %vm1091, %v1082
      %1148 = vst.msk [vmem:[%s175 + $0x1c0] sm:$0xff] %vm1091, %v1083
      %1149 = vst.msk [vmem:[%s175 + $0x1c8] sm:$0xff] %vm1091, %v1084
      %1150 = vst.msk [vmem:[%s175 + $0x1d0] sm:$0xff] %vm1091, %v1085
      %1151 = vst.msk [vmem:[%s175 + $0x1d8] sm:$0xff] %vm1091, %v1086
      %1152 = vst.msk [vmem:[%s175 + $0x1e0] sm:$0xff] %vm1091, %v1087
      %1153 = vst.msk [vmem:[%s175 + $0x1e8] sm:$0xff] %vm1091, %v1088
      %1154 = vst.msk [vmem:[%s175 + $0x1f0] sm:$0xff] %vm1091, %v1089
      %1155 = vst.msk [vmem:[%s175 + $0x1f8] sm:$0xff] %vm1091, %v1090
      %s1156 = smul.u32 64, %s14
      %p1157 = scmp.lt.s32.totalorder %s1156, 255
      %s1158 = scalar_select %p1157, %s1156, 255
      %s1159 = smul.addr %s1158, 8
      %s1160 = scalar_lea.vmem %s3, %s1159
      // Predicated region
      $region33: #{tpu_custom_call.1} parent=31 // pred_check
        %p1161 = pneg %p100
      $region34: #{tpu_custom_call.1} parent=31 // pred_check_branch
        %1163 = sbr.rel (%p1161) target = $region36
      $region35: #{tpu_custom_call.1} parent=31 // pred_region
        %s1164 = smul.u32 64, %s14
      $region36: #{tpu_custom_call.1} parent=31 // pred_fallthru
        _
    $region32: #{tpu_custom_call.1} parent=5 // pred_fallthru
      _
    %p1165 = scmp.le.s32.totalorder 2, %s9
    // Predicated region
    $region37: #{tpu_custom_call.1} parent=5 // pred_check
      %p1166 = pneg %p1165
    $region38: #{tpu_custom_call.1} parent=5 // pred_check_branch
      %1168 = sbr.rel (%p1166) target = $region40
    $region39: #{tpu_custom_call.1} parent=5 // pred_region
      %s1169 = ssub.s32 %s9, 2
      // Predicated region
      $region41: #{tpu_custom_call.1} parent=39 // pred_check
        %p1170 = pneg %p106
      $region42: #{tpu_custom_call.1} parent=39 // pred_check_branch
        %1172 = sbr.rel (%p1170) target = $region44
      $region43: #{tpu_custom_call.1} parent=39 // pred_region
        %s1173 = smul.u32 64, %s15
        %p1174 = scmp.lt.s32.totalorder %s1173, 255
        %s1175 = scalar_select %p1174, %s1173, 255
        %s1176 = smul.addr %s1175, 8
        %s1177 = scalar_lea.vmem %s3, %s1176
      $region44: #{tpu_custom_call.1} parent=39 // pred_fallthru
        _
    $region40: #{tpu_custom_call.1} parent=5 // pred_fallthru
      _
  $region6: #{tpu_custom_call.1} parent=0 // loop_footer
    %s13 = sadd.s32 1, %s9
  $region7: #{tpu_custom_call.1} parent=0 // loop_footer_branch
    %8 = sbr.rel target = $region3
  $region8: #{tpu_custom_call.1} parent=0 // loop_exit
    _

</llo_original>
